<compile_context>
chip_gen: v7x
topology: tpu7x:2x2x1
jax: 0.10.0
libtpu: 0.0.40
codegen_flags: <defaults>
</compile_context>

<pallas_src>
from functools import partial

import jax
import jax.numpy as jnp
from jax.experimental import pallas as pl
from jax.experimental.pallas import tpu as pltpu


def rnn_kernel(x_ref, h0_ref, wih_t_ref, whh_t_ref, bcomb_ref,
               wout_t_ref, bout_ref, y_ref, hT_ref):
    # Static shapes (trace-time Python ints).
    B, H = h0_ref.shape
    TB = x_ref.shape[0]
    T = TB // B

    # (1) Input projection for ALL timesteps at once (off the serial chain):
    #     P = X @ W_ih^T + (b_ih + b_hh)   -> (T*B, H), kept in vregs.
    p = (jnp.dot(x_ref[...].astype(jnp.bfloat16), wih_t_ref[...],
                 preferred_element_type=jnp.float32)
         + bcomb_ref[...])

    # (2) Serial recurrence entirely in vregs: per step only a bf16
    #     h @ W_hh^T (MXU, f32 accumulate) + tanh (EUP) on the critical path.
    whh = whh_t_ref[...]                      # (H, H) bf16, loaded once
    h = h0_ref[...]                           # (B, H) f32
    hs = []
    for t in range(T):                        # fully unrolled, static slices
        h = jnp.tanh(p[t * B:(t + 1) * B, :]
                     + jnp.dot(h.astype(jnp.bfloat16), whh,
                               preferred_element_type=jnp.float32))
        hs.append(h)

    # Final hidden state for the module's stateful carry (self.h).
    hT_ref[...] = h

    # (3) Linear head over all timesteps at once (one f32 matmul) and a
    #     single lane-dense store (last dim padded to a multiple of 128).
    hs_all = jnp.concatenate(hs, axis=0)      # (T*B, H), still in vregs
    y_ref[...] = (jnp.dot(hs_all, wout_t_ref[...],
                          preferred_element_type=jnp.float32)
                  + bout_ref[...]).astype(y_ref.dtype)


def prepare_rnn_params(w_ih, w_hh, b_ih, b_hh, w_out, b_out):
    """One-time parameter prep (pure layout plumbing), hoisted out of the
    per-forward path: pre-transpose, fold the two RNN biases, bf16-cast the
    recurrent weights, pad the head to a lane-dense (multiple-of-128) width."""
    H = w_hh.shape[0]
    O = w_out.shape[0]
    O_pad = ((O + 127) // 128) * 128
    return {
        "wih_t": w_ih.T.astype(jnp.bfloat16),                          # (I, H)
        "whh_t": w_hh.T.astype(jnp.bfloat16),                          # (H, H)
        "bcomb": (b_ih + b_hh).reshape(1, H).astype(jnp.float32),      # (1, H)
        "wout_t": jnp.pad(w_out.T, ((0, 0), (0, O_pad - O))).astype(jnp.float32),
        "bout": jnp.pad(b_out, (0, O_pad - O)).reshape(1, O_pad).astype(jnp.float32),
        "output_size": O,
    }


@partial(jax.jit, static_argnames=("output_size",))
def rnn_forward(x, h0, wih_t, whh_t, bcomb, wout_t, bout, *, output_size):
    """x: (T, B, I) f32.  Returns (y: (T, B, O) f32, h_T: (B, H) f32)."""
    T, B, I = x.shape
    H = h0.shape[1]
    O = output_size
    O_pad = wout_t.shape[1]

    x2d = x.reshape(T * B, I)                         # per-call layout only
    vmem_spec = pl.BlockSpec(memory_space=pltpu.MemorySpace.VMEM)

    y_pad, h_last = pl.pallas_call(
        rnn_kernel,
        out_shape=(jax.ShapeDtypeStruct((T * B, O_pad), jnp.float32),
                   jax.ShapeDtypeStruct((B, H), jnp.float32)),
        in_specs=[vmem_spec] * 7,                     # everything VMEM-resident
        out_specs=(vmem_spec, vmem_spec),
    )(x2d, h0, wih_t, whh_t, bcomb, wout_t, bout)

    return y_pad[:, :O].reshape(T, B, O), h_last


def rnn_reference(x, h0, w_ih, w_hh, b_ih, b_hh, w_out, b_out):
    """Pure-JAX f32 reference (matches torch.nn.RNN + Linear)."""
    def step(h, x_t):
        h_new = jnp.tanh(x_t @ w_ih.T + b_ih + h @ w_hh.T + b_hh)
        return h_new, h_new
    h_last, states = jax.lax.scan(step, h0, x)
    return states @ w_out.T + b_out, h_last


if __name__ == "__main__":
    # Small shapes consistent with the module: seq=8, batch=2,
    # input_size=4, hidden_size=32, output_size=8.
    T, B, I, H, O = 8, 2, 4, 32, 8

    key = jax.random.PRNGKey(0)
    ks = jax.random.split(key, 8)
    bound = 1.0 / jnp.sqrt(H)
    # Deterministic parameter init (uniform, matching torch's init scale).
    w_ih = jax.random.uniform(ks[0], (H, I), jnp.float32, -bound, bound)
    w_hh = jax.random.uniform(ks[1], (H, H), jnp.float32, -bound, bound)
    b_ih = jax.random.uniform(ks[2], (H,), jnp.float32, -bound, bound)
    b_hh = jax.random.uniform(ks[3], (H,), jnp.float32, -bound, bound)
    w_out = jax.random.uniform(ks[4], (O, H), jnp.float32, -bound, bound)
    b_out = jax.random.uniform(ks[5], (O,), jnp.float32, -bound, bound)

    x = jax.random.normal(ks[6], (T, B, I), jnp.float32)
    # self.h is None on first call -> zero initial hidden state.
    h0 = jnp.zeros((B, H), jnp.float32)
    # TODO(synk): the stateful carry (self.h across training calls) is
    # host-side bookkeeping; feed the returned h_T back in as h0 when needed.

    # One-time weight prep, outside the per-forward path.
    params = prepare_rnn_params(w_ih, w_hh, b_ih, b_hh, w_out, b_out)

    y, h_last = rnn_forward(
        x, h0,
        params["wih_t"], params["whh_t"], params["bcomb"],
        params["wout_t"], params["bout"],
        output_size=params["output_size"])
    y, h_last = jax.block_until_ready((y, h_last))

    y_ref, h_ref = rnn_reference(x, h0, w_ih, w_hh, b_ih, b_hh, w_out, b_out)
    assert y.shape == (T, B, O)
    assert h_last.shape == (B, H)
    # bf16 recurrence/projection weights (f32 accumulate) vs the f32
    # reference: tolerance loosened accordingly (per the perf review).
    assert jnp.allclose(y, y_ref, atol=5e-2, rtol=5e-2), "output mismatch vs reference"
    assert jnp.allclose(h_last, h_ref, atol=5e-2, rtol=5e-2), "h_T mismatch vs reference"

    print("KERNEL_OK")
</pallas_src>

<mosaic_0001>
module attributes {stable_mosaic.version = 11 : i64} {
  func.func @rnn_kernel(%arg0: memref<16x4xf32, #tpu.memory_space<vmem>>, %arg1: memref<2x32xf32, #tpu.memory_space<vmem>>, %arg2: memref<4x32xbf16, #tpu.memory_space<vmem>>, %arg3: memref<32x32xbf16, #tpu.memory_space<vmem>>, %arg4: memref<1x32xf32, #tpu.memory_space<vmem>>, %arg5: memref<32x128xf32, #tpu.memory_space<vmem>>, %arg6: memref<1x128xf32, #tpu.memory_space<vmem>>, %arg7: memref<16x128xf32, #tpu.memory_space<vmem>>, %arg8: memref<2x32xf32, #tpu.memory_space<vmem>>) attributes {dimension_semantics = [], scalar_prefetch = 0 : i64, scratch_operands = 0 : i64, tpu.core_type = #tpu.core_type<tc>} {
    %c0 = arith.constant 0 : index
    %c0_0 = arith.constant 0 : index
    %0 = vector.load %arg0[%c0, %c0_0] : memref<16x4xf32, #tpu.memory_space<vmem>>, vector<16x4xf32>
    %1 = arith.truncf %0 : vector<16x4xf32> to vector<16x4xbf16>
    %c0_1 = arith.constant 0 : index
    %c0_2 = arith.constant 0 : index
    %2 = vector.load %arg2[%c0_1, %c0_2] : memref<4x32xbf16, #tpu.memory_space<vmem>>, vector<4x32xbf16>
    %cst = arith.constant dense<0.000000e+00> : vector<16x32xf32>
    %3 = tpu.matmul %1, %2, %cst {dimension_numbers = #tpu.dot_dimension_numbers<[1], [0], [0], [1], [0, 0, 1, 1], [], []>} : vector<16x4xbf16>, vector<4x32xbf16>, vector<16x32xf32> -> vector<16x32xf32>
    %c0_3 = arith.constant 0 : index
    %c0_4 = arith.constant 0 : index
    %4 = vector.load %arg4[%c0_3, %c0_4] : memref<1x32xf32, #tpu.memory_space<vmem>>, vector<1x32xf32>
    %5 = vector.broadcast %4 : vector<1x32xf32> to vector<16x32xf32>
    %6 = arith.addf %3, %5 : vector<16x32xf32>
    %c0_5 = arith.constant 0 : index
    %c0_6 = arith.constant 0 : index
    %7 = vector.load %arg3[%c0_5, %c0_6] : memref<32x32xbf16, #tpu.memory_space<vmem>>, vector<32x32xbf16>
    %c0_7 = arith.constant 0 : index
    %c0_8 = arith.constant 0 : index
    %8 = vector.load %arg1[%c0_7, %c0_8] : memref<2x32xf32, #tpu.memory_space<vmem>>, vector<2x32xf32>
    %9 = vector.extract_strided_slice %6 {offsets = [0, 0], sizes = [2, 32], strides = [1, 1]} : vector<16x32xf32> to vector<2x32xf32>
    %10 = arith.truncf %8 : vector<2x32xf32> to vector<2x32xbf16>
    %cst_9 = arith.constant dense<0.000000e+00> : vector<2x32xf32>
    %11 = tpu.matmul %10, %7, %cst_9 {dimension_numbers = #tpu.dot_dimension_numbers<[1], [0], [0], [1], [0, 0, 1, 1], [], []>} : vector<2x32xbf16>, vector<32x32xbf16>, vector<2x32xf32> -> vector<2x32xf32>
    %12 = arith.addf %9, %11 : vector<2x32xf32>
    %13 = math.tanh %12 : vector<2x32xf32>
    %14 = vector.extract_strided_slice %6 {offsets = [2, 0], sizes = [2, 32], strides = [1, 1]} : vector<16x32xf32> to vector<2x32xf32>
    %15 = arith.truncf %13 : vector<2x32xf32> to vector<2x32xbf16>
    %cst_10 = arith.constant dense<0.000000e+00> : vector<2x32xf32>
    %16 = tpu.matmul %15, %7, %cst_10 {dimension_numbers = #tpu.dot_dimension_numbers<[1], [0], [0], [1], [0, 0, 1, 1], [], []>} : vector<2x32xbf16>, vector<32x32xbf16>, vector<2x32xf32> -> vector<2x32xf32>
    %17 = arith.addf %14, %16 : vector<2x32xf32>
    %18 = math.tanh %17 : vector<2x32xf32>
    %19 = vector.extract_strided_slice %6 {offsets = [4, 0], sizes = [2, 32], strides = [1, 1]} : vector<16x32xf32> to vector<2x32xf32>
    %20 = arith.truncf %18 : vector<2x32xf32> to vector<2x32xbf16>
    %cst_11 = arith.constant dense<0.000000e+00> : vector<2x32xf32>
    %21 = tpu.matmul %20, %7, %cst_11 {dimension_numbers = #tpu.dot_dimension_numbers<[1], [0], [0], [1], [0, 0, 1, 1], [], []>} : vector<2x32xbf16>, vector<32x32xbf16>, vector<2x32xf32> -> vector<2x32xf32>
    %22 = arith.addf %19, %21 : vector<2x32xf32>
    %23 = math.tanh %22 : vector<2x32xf32>
    %24 = vector.extract_strided_slice %6 {offsets = [6, 0], sizes = [2, 32], strides = [1, 1]} : vector<16x32xf32> to vector<2x32xf32>
    %25 = arith.truncf %23 : vector<2x32xf32> to vector<2x32xbf16>
    %cst_12 = arith.constant dense<0.000000e+00> : vector<2x32xf32>
    %26 = tpu.matmul %25, %7, %cst_12 {dimension_numbers = #tpu.dot_dimension_numbers<[1], [0], [0], [1], [0, 0, 1, 1], [], []>} : vector<2x32xbf16>, vector<32x32xbf16>, vector<2x32xf32> -> vector<2x32xf32>
    %27 = arith.addf %24, %26 : vector<2x32xf32>
    %28 = math.tanh %27 : vector<2x32xf32>
    %29 = vector.extract_strided_slice %6 {offsets = [8, 0], sizes = [2, 32], strides = [1, 1]} : vector<16x32xf32> to vector<2x32xf32>
    %30 = arith.truncf %28 : vector<2x32xf32> to vector<2x32xbf16>
    %cst_13 = arith.constant dense<0.000000e+00> : vector<2x32xf32>
    %31 = tpu.matmul %30, %7, %cst_13 {dimension_numbers = #tpu.dot_dimension_numbers<[1], [0], [0], [1], [0, 0, 1, 1], [], []>} : vector<2x32xbf16>, vector<32x32xbf16>, vector<2x32xf32> -> vector<2x32xf32>
    %32 = arith.addf %29, %31 : vector<2x32xf32>
    %33 = math.tanh %32 : vector<2x32xf32>
    %34 = vector.extract_strided_slice %6 {offsets = [10, 0], sizes = [2, 32], strides = [1, 1]} : vector<16x32xf32> to vector<2x32xf32>
    %35 = arith.truncf %33 : vector<2x32xf32> to vector<2x32xbf16>
    %cst_14 = arith.constant dense<0.000000e+00> : vector<2x32xf32>
    %36 = tpu.matmul %35, %7, %cst_14 {dimension_numbers = #tpu.dot_dimension_numbers<[1], [0], [0], [1], [0, 0, 1, 1], [], []>} : vector<2x32xbf16>, vector<32x32xbf16>, vector<2x32xf32> -> vector<2x32xf32>
    %37 = arith.addf %34, %36 : vector<2x32xf32>
    %38 = math.tanh %37 : vector<2x32xf32>
    %39 = vector.extract_strided_slice %6 {offsets = [12, 0], sizes = [2, 32], strides = [1, 1]} : vector<16x32xf32> to vector<2x32xf32>
    %40 = arith.truncf %38 : vector<2x32xf32> to vector<2x32xbf16>
    %cst_15 = arith.constant dense<0.000000e+00> : vector<2x32xf32>
    %41 = tpu.matmul %40, %7, %cst_15 {dimension_numbers = #tpu.dot_dimension_numbers<[1], [0], [0], [1], [0, 0, 1, 1], [], []>} : vector<2x32xbf16>, vector<32x32xbf16>, vector<2x32xf32> -> vector<2x32xf32>
    %42 = arith.addf %39, %41 : vector<2x32xf32>
    %43 = math.tanh %42 : vector<2x32xf32>
    %44 = vector.extract_strided_slice %6 {offsets = [14, 0], sizes = [2, 32], strides = [1, 1]} : vector<16x32xf32> to vector<2x32xf32>
    %45 = arith.truncf %43 : vector<2x32xf32> to vector<2x32xbf16>
    %cst_16 = arith.constant dense<0.000000e+00> : vector<2x32xf32>
    %46 = tpu.matmul %45, %7, %cst_16 {dimension_numbers = #tpu.dot_dimension_numbers<[1], [0], [0], [1], [0, 0, 1, 1], [], []>} : vector<2x32xbf16>, vector<32x32xbf16>, vector<2x32xf32> -> vector<2x32xf32>
    %47 = arith.addf %44, %46 : vector<2x32xf32>
    %48 = math.tanh %47 : vector<2x32xf32>
    %c0_17 = arith.constant 0 : index
    %c0_18 = arith.constant 0 : index
    %49 = vector.load %arg8[%c0_17, %c0_18] : memref<2x32xf32, #tpu.memory_space<vmem>>, vector<2x32xf32>
    tpu.vector_store %arg8[%c0_17, %c0_18], %48 {strides = array<i32>} : memref<2x32xf32, #tpu.memory_space<vmem>>, vector<2x32xf32>,
    %50 = tpu.concatenate %13, %18, %23, %28, %33, %38, %43, %48 in 0 : vector<2x32xf32>, vector<2x32xf32>, vector<2x32xf32>, vector<2x32xf32>, vector<2x32xf32>, vector<2x32xf32>, vector<2x32xf32>, vector<2x32xf32> -> vector<16x32xf32>
    %c0_19 = arith.constant 0 : index
    %c0_20 = arith.constant 0 : index
    %51 = vector.load %arg5[%c0_19, %c0_20] : memref<32x128xf32, #tpu.memory_space<vmem>>, vector<32x128xf32>
    %cst_21 = arith.constant dense<0.000000e+00> : vector<16x128xf32>
    %52 = tpu.matmul %50, %51, %cst_21 {dimension_numbers = #tpu.dot_dimension_numbers<[1], [0], [0], [1], [0, 0, 1, 1], [], []>} : vector<16x32xf32>, vector<32x128xf32>, vector<16x128xf32> -> vector<16x128xf32>
    %c0_22 = arith.constant 0 : index
    %c0_23 = arith.constant 0 : index
    %53 = vector.load %arg6[%c0_22, %c0_23] : memref<1x128xf32, #tpu.memory_space<vmem>>, vector<1x128xf32>
    %54 = vector.broadcast %53 : vector<1x128xf32> to vector<16x128xf32>
    %55 = arith.addf %52, %54 : vector<16x128xf32>
    %c0_24 = arith.constant 0 : index
    %c0_25 = arith.constant 0 : index
    %56 = vector.load %arg7[%c0_24, %c0_25] : memref<16x128xf32, #tpu.memory_space<vmem>>, vector<16x128xf32>
    tpu.vector_store %arg7[%c0_24, %c0_25], %55 {strides = array<i32>} : memref<16x128xf32, #tpu.memory_space<vmem>>, vector<16x128xf32>,
    return
  }
}

</mosaic_0001>

<llo_original>
// kernel: rnn_forward.1
$region0: #{rnn_forward.1}
  #allocation0 [shape = 'u32[]', space=smem, size = 0x4, offset = 0x4, fixed_abs, tag = 'smem constant byte address 0x4 - core index']
  #allocation1 [shape = 'u32[144,128]{1,0:T(1,128)}', space=vmem, size = 0x12000, scoped, tag = 'internal scratch']
  %s0 = inlined_call_operand.vmem [shape: f32[16,4], index: 0, kind: input, shape index: {}]
  %s1 = inlined_call_operand.vmem [shape: f32[2,32], index: 1, kind: input, shape index: {}]
  %s2 = inlined_call_operand.vmem [shape: bf16[4,32], index: 2, kind: input, shape index: {}]
  %s3 = inlined_call_operand.hbm [shape: bf16[32,32], index: 3, kind: input, shape index: {}]
  %s4 = inlined_call_operand.vmem [shape: f32[1,32], index: 4, kind: input, shape index: {}]
  %s5 = inlined_call_operand.vmem [shape: f32[32,128], index: 5, kind: input, shape index: {}]
  %s6 = inlined_call_operand.vmem [shape: f32[1,128], index: 6, kind: input, shape index: {}]
  %s7 = inlined_call_operand.hbm [shape: f32[16,128], index: 7, kind: output, shape index: {0}]
  %s8 = inlined_call_operand.hbm [shape: f32[2,32], index: 8, kind: output, shape index: {1}]
  %9 = xla_tuple %s7, %s8
  %s10 = sld [smem:[#allocation0]]
  $region50: #{rnn_forward.1} parent=0
    _
  %s12 = ssub.s32 1, %s10
  %s13 = scalar_select 0, %s12, %s10
  $region1: #{rnn_forward.1} parent=0
    #allocation2 [shape = 'u8[8192]{0}', space=vmem, size = 0x2000, scoped, tag = 'input window, operand 3, single buffered']
    #allocation3 [shape = 's32[1]{0}', space=sflag, size = 0x4, scoped, tag = 'scoped memory for rnn_forward.1']
    #allocation4 [shape = 's32[1]{0}', space=sflag, size = 0x4, scoped, tag = 'scoped memory for rnn_forward.1']
    #allocation5 [shape = 'u8[8192]{0}', space=vmem, size = 0x2000, scoped, tag = 'output window, operand 0, single buffered']
    #allocation6 [shape = 'u8[1024]{0}', space=vmem, size = 0x400, scoped, tag = 'output window, operand 1, single buffered']
    #allocation7 [shape = 's32[1]{0}', space=sflag, size = 0x4, scoped, tag = 'scoped memory for rnn_forward.1']
    %14 = vsyncpa [#allocation3], 0
    %15 = vsyncpa [#allocation4], 0
    %16 = vsyncpa [#allocation7], 0
    // Predicated region
    $region2: #{rnn_forward.1} parent=1 // pred_check
      _
    $region3: #{rnn_forward.1} parent=1 // pred_check_branch
      %18 = sbr.rel (0) target = $region5
    $region4: #{rnn_forward.1} parent=1 // pred_region
      _
    $region5: #{rnn_forward.1} parent=1 // pred_fallthru
      _
    // Predicated region
    $region6: #{rnn_forward.1} parent=1 // pred_check
      _
    $region7: #{rnn_forward.1} parent=1 // pred_check_branch
      %20 = sbr.rel (0) target = $region9
    $region8: #{rnn_forward.1} parent=1 // pred_region
      _
    $region9: #{rnn_forward.1} parent=1 // pred_fallthru
      _
    // Predicated region
    $region10: #{rnn_forward.1} parent=1 // pred_check
      _
    $region11: #{rnn_forward.1} parent=1 // pred_check_branch
      %22 = sbr.rel (0) target = $region13
    $region12: #{rnn_forward.1} parent=1 // pred_region
      _
    $region13: #{rnn_forward.1} parent=1 // pred_fallthru
      _
    // Predicated region
    $region14: #{rnn_forward.1} parent=1 // pred_check
      _
    $region15: #{rnn_forward.1} parent=1 // pred_check_branch
      %24 = sbr.rel (0) target = $region17
    $region16: #{rnn_forward.1} parent=1 // pred_region
      %s26 = ssub.s32 256, 256
      %27 = vsyncadd [#allocation3], %s26
      %s28 = sshll.u32 [#allocation2], 4
      %s29 = int_to_ptr.vmem [resolvable:$true] %s28
      %34 = dma.hbm_to_vmem [thread:$0]  %s3, 256, %s29, [#allocation3], 64, 64, 4
    $region17: #{rnn_forward.1} parent=1 // pred_fallthru
      _
    // Predicated region
    $region18: #{rnn_forward.1} parent=1 // pred_check
      _
    $region19: #{rnn_forward.1} parent=1 // pred_check_branch
      %36 = sbr.rel (0) target = $region21
    $region20: #{rnn_forward.1} parent=1 // pred_region
      _
    $region21: #{rnn_forward.1} parent=1 // pred_fallthru
      _
    // Predicated region
    $region22: #{rnn_forward.1} parent=1 // pred_check
      _
    $region23: #{rnn_forward.1} parent=1 // pred_check_branch
      %38 = sbr.rel (0) target = $region25
    $region24: #{rnn_forward.1} parent=1 // pred_region
      _
    $region25: #{rnn_forward.1} parent=1 // pred_fallthru
      _
    // Predicated region
    $region26: #{rnn_forward.1} parent=1 // pred_check
      _
    $region27: #{rnn_forward.1} parent=1 // pred_check_branch
      %40 = sbr.rel (0) target = $region29
    $region28: #{rnn_forward.1} parent=1 // pred_region
      _
    $region29: #{rnn_forward.1} parent=1 // pred_fallthru
      _
    // Predicated region
    $region30: #{rnn_forward.1} parent=1 // pred_check
      _
    $region31: #{rnn_forward.1} parent=1 // pred_check_branch
      %42 = sbr.rel (0) target = $region33
    $region32: #{rnn_forward.1} parent=1 // pred_region
      %43 = dma.done [#allocation3], 256
    $region33: #{rnn_forward.1} parent=1 // pred_fallthru
      _
    %v45 = vld [vmem:[%s0] sm:$0xff]
    %v46 = vld [vmem:[%s0 + $0x8] sm:$0xff]
    %v47 = vpack.c.bf16 %v46, %v45
    %v48 = vld [vmem:[%s2] sm:$0x3]
    %v49 = vld [vmem:[%s4] sm:$0x1]
    %v51 = vlaneseq
    %v52 = vshrl.u32 %v51, 7
    %v53 = vsub.s32 0, %v52
    %v54 = vrot.slane %v49, %v53
    %vm56 = vcmask 31744
    %v58 = vsel %vm56, %v47, 0
    %vm60 = vcmask 1041408
    %v62 = vsel %vm60, %v48, 0
    %64 = vmatprep.subr.bf16.mxu0 0
    %65 = vmatpush1.bf16.msra.mxu0 %v62
    %66 = vmatprep.subr.bf16.mxu0 0
    %67 = vmatpush1.bf16.msra.mxu0 0
    %68 = vmatprep.subr.bf16.mxu0 0
    %69 = vmatpush1.bf16.msra.mxu0 0
    %70 = vmatprep.subr.bf16.mxu0 0
    %71 = vmatpush1.bf16.msra.mxu0 0
    %72 = vmatprep.subr.bf16.mxu0 0
    %73 = vmatpush1.bf16.msra.mxu0 0
    %74 = vmatprep.subr.bf16.mxu0 0
    %75 = vmatpush1.bf16.msra.mxu0 0
    %76 = vmatprep.subr.bf16.mxu0 0
    %77 = vmatpush1.bf16.msra.mxu0 0
    %78 = vmatprep.subr.bf16.mxu0 0
    %79 = vmatpush1.bf16.msra.mxu0 0
    %80 = vmatprep.subr.bf16.mxu0 0
    %81 = vmatpush1.bf16.msra.mxu0 0
    %82 = vmatprep.subr.bf16.mxu0 0
    %83 = vmatpush1.bf16.msra.mxu0 0
    %84 = vmatprep.subr.bf16.mxu0 0
    %85 = vmatpush1.bf16.msra.mxu0 0
    %86 = vmatprep.subr.bf16.mxu0 0
    %87 = vmatpush1.bf16.msra.mxu0 0
    %88 = vmatprep.subr.bf16.mxu0 0
    %89 = vmatpush1.bf16.msra.mxu0 0
    %90 = vmatprep.subr.bf16.mxu0 0
    %91 = vmatpush1.bf16.msra.mxu0 0
    %92 = vmatprep.subr.bf16.mxu0 0
    %93 = vmatpush1.bf16.msra.mxu0 0
    %94 = vmatprep.subr.bf16.mxu0 0
    %95 = vmatpush1.bf16.msra.mxu0 0
    %96 = vmatprep.mubr.bf16.mxu0 0
    %97 = vmatmul.mubr.bf16.gmra.mrb[0].mxu0 %v58
    %v98 = vpop.f32.mrb[0].mxu0
    %v99 = vadd.f32 %v54, %v98
    %v100 = vpop.f32.mrb[0].mxu0
    %v101 = vpop.f32.mrb[0].mxu0
    %v102 = vadd.f32 %v54, %v101
    %v103 = vpop.f32.mrb[0].mxu0
    %104 = vdwg.mxu0
    %v105 = vld [vmem:[#allocation2] sm:$0xf]
    %v106 = vld [vmem:[#allocation2 + $0x4] sm:$0xf]
    %v107 = vld [vmem:[#allocation2 + $0x8] sm:$0xf]
    %v108 = vld [vmem:[#allocation2 + $0xc] sm:$0xf]
    %v109 = vld [vmem:[%s1] sm:$0x3]
    %v110 = vpack.c.bf16 %v109, %v109
    %v115 = vunpack.c.l.b16 %v105
    %v116 = vunpack.c.l.b16 %v106
    %v117 = vunpack.c.l.b16 %v107
    %v118 = vunpack.c.l.b16 %v108
    %v119 = vpack.c.b16 %v116, %v115
    %v120 = vpack.c.b16 %v118, %v117
    %vm123 = vcmask 261120
    %v125 = vsel %vm123, %v110, 0
    %127 = vmatprep.subr.bf16.mxu0 0
    %128 = vmatpush1.bf16.msra.mxu0 %v119
    %129 = vmatprep.subr.bf16.mxu0 0
    %130 = vmatpush1.bf16.msra.mxu0 %v120
    %131 = vmatprep.subr.bf16.mxu0 0
    %132 = vmatpush1.bf16.msra.mxu0 0
    %133 = vmatprep.subr.bf16.mxu0 0
    %134 = vmatpush1.bf16.msra.mxu0 0
    %135 = vmatprep.subr.bf16.mxu0 0
    %136 = vmatpush1.bf16.msra.mxu0 0
    %137 = vmatprep.subr.bf16.mxu0 0
    %138 = vmatpush1.bf16.msra.mxu0 0
    %139 = vmatprep.subr.bf16.mxu0 0
    %140 = vmatpush1.bf16.msra.mxu0 0
    %141 = vmatprep.subr.bf16.mxu0 0
    %142 = vmatpush1.bf16.msra.mxu0 0
    %143 = vmatprep.subr.bf16.mxu0 0
    %144 = vmatpush1.bf16.msra.mxu0 0
    %145 = vmatprep.subr.bf16.mxu0 0
    %146 = vmatpush1.bf16.msra.mxu0 0
    %147 = vmatprep.subr.bf16.mxu0 0
    %148 = vmatpush1.bf16.msra.mxu0 0
    %149 = vmatprep.subr.bf16.mxu0 0
    %150 = vmatpush1.bf16.msra.mxu0 0
    %151 = vmatprep.subr.bf16.mxu0 0
    %152 = vmatpush1.bf16.msra.mxu0 0
    %153 = vmatprep.subr.bf16.mxu0 0
    %154 = vmatpush1.bf16.msra.mxu0 0
    %155 = vmatprep.subr.bf16.mxu0 0
    %156 = vmatpush1.bf16.msra.mxu0 0
    %157 = vmatprep.subr.bf16.mxu0 0
    %158 = vmatpush1.bf16.msra.mxu0 0
    %159 = vmatprep.mubr.bf16.mxu0 0
    %160 = vmatmul.mubr.bf16.gmra.mrb[0].mxu0 %v125
    %v161 = vpop.f32.mrb[0].mxu0
    %v162 = vadd.f32 0.0, %v161
    %v163 = vpop.f32.mrb[0].mxu0
    %v164 = vpop.f32.mrb[0].mxu0
    %v165 = vpop.f32.mrb[0].mxu0
    %166 = vdwg.mxu0
    %v167 = vadd.f32 %v99, %v162
    %v168 = vtanh.pop %v167
    %v169 = vpack.c.bf16 %v168, %v168
    %v171 = vsel %vm123, %v169, 0
    %173 = vmatprep.subr.bf16.mxu0 0
    %174 = vmatpush1.bf16.msra.mxu0 %v119
    %175 = vmatprep.subr.bf16.mxu0 0
    %176 = vmatpush1.bf16.msra.mxu0 %v120
    %177 = vmatprep.subr.bf16.mxu0 0
    %178 = vmatpush1.bf16.msra.mxu0 0
    %179 = vmatprep.subr.bf16.mxu0 0
    %180 = vmatpush1.bf16.msra.mxu0 0
    %181 = vmatprep.subr.bf16.mxu0 0
    %182 = vmatpush1.bf16.msra.mxu0 0
    %183 = vmatprep.subr.bf16.mxu0 0
    %184 = vmatpush1.bf16.msra.mxu0 0
    %185 = vmatprep.subr.bf16.mxu0 0
    %186 = vmatpush1.bf16.msra.mxu0 0
    %187 = vmatprep.subr.bf16.mxu0 0
    %188 = vmatpush1.bf16.msra.mxu0 0
    %189 = vmatprep.subr.bf16.mxu0 0
    %190 = vmatpush1.bf16.msra.mxu0 0
    %191 = vmatprep.subr.bf16.mxu0 0
    %192 = vmatpush1.bf16.msra.mxu0 0
    %193 = vmatprep.subr.bf16.mxu0 0
    %194 = vmatpush1.bf16.msra.mxu0 0
    %195 = vmatprep.subr.bf16.mxu0 0
    %196 = vmatpush1.bf16.msra.mxu0 0
    %197 = vmatprep.subr.bf16.mxu0 0
    %198 = vmatpush1.bf16.msra.mxu0 0
    %199 = vmatprep.subr.bf16.mxu0 0
    %200 = vmatpush1.bf16.msra.mxu0 0
    %201 = vmatprep.subr.bf16.mxu0 0
    %202 = vmatpush1.bf16.msra.mxu0 0
    %203 = vmatprep.subr.bf16.mxu0 0
    %204 = vmatpush1.bf16.msra.mxu0 0
    %205 = vmatprep.mubr.bf16.mxu0 0
    %206 = vmatmul.mubr.bf16.gmra.mrb[0].mxu0 %v171
    %v207 = vpop.f32.mrb[0].mxu0
    %v208 = vadd.f32 0.0, %v207
    %v209 = vpop.f32.mrb[0].mxu0
    %v210 = vpop.f32.mrb[0].mxu0
    %v211 = vpop.f32.mrb[0].mxu0
    %212 = vdwg.mxu0
    %v214 = vrot.slane %v208, 6
    %v216 = vadd.f32 %v99, %v214
    %v217 = vtanh.pop %v216
    %v218 = vpack.c.bf16 %v217, %v217
    %v220 = vrot.slane %v218, 1
    %v222 = vsel %vm123, %v220, 0
    %224 = vmatprep.subr.bf16.mxu0 0
    %225 = vmatpush1.bf16.msra.mxu0 %v119
    %226 = vmatprep.subr.bf16.mxu0 0
    %227 = vmatpush1.bf16.msra.mxu0 %v120
    %228 = vmatprep.subr.bf16.mxu0 0
    %229 = vmatpush1.bf16.msra.mxu0 0
    %230 = vmatprep.subr.bf16.mxu0 0
    %231 = vmatpush1.bf16.msra.mxu0 0
    %232 = vmatprep.subr.bf16.mxu0 0
    %233 = vmatpush1.bf16.msra.mxu0 0
    %234 = vmatprep.subr.bf16.mxu0 0
    %235 = vmatpush1.bf16.msra.mxu0 0
    %236 = vmatprep.subr.bf16.mxu0 0
    %237 = vmatpush1.bf16.msra.mxu0 0
    %238 = vmatprep.subr.bf16.mxu0 0
    %239 = vmatpush1.bf16.msra.mxu0 0
    %240 = vmatprep.subr.bf16.mxu0 0
    %241 = vmatpush1.bf16.msra.mxu0 0
    %242 = vmatprep.subr.bf16.mxu0 0
    %243 = vmatpush1.bf16.msra.mxu0 0
    %244 = vmatprep.subr.bf16.mxu0 0
    %245 = vmatpush1.bf16.msra.mxu0 0
    %246 = vmatprep.subr.bf16.mxu0 0
    %247 = vmatpush1.bf16.msra.mxu0 0
    %248 = vmatprep.subr.bf16.mxu0 0
    %249 = vmatpush1.bf16.msra.mxu0 0
    %250 = vmatprep.subr.bf16.mxu0 0
    %251 = vmatpush1.bf16.msra.mxu0 0
    %252 = vmatprep.subr.bf16.mxu0 0
    %253 = vmatpush1.bf16.msra.mxu0 0
    %254 = vmatprep.subr.bf16.mxu0 0
    %255 = vmatpush1.bf16.msra.mxu0 0
    %256 = vmatprep.mubr.bf16.mxu0 0
    %257 = vmatmul.mubr.bf16.gmra.mrb[0].mxu0 %v222
    %v258 = vpop.f32.mrb[0].mxu0
    %v259 = vadd.f32 0.0, %v258
    %v260 = vpop.f32.mrb[0].mxu0
    %v261 = vpop.f32.mrb[0].mxu0
    %v262 = vpop.f32.mrb[0].mxu0
    %263 = vdwg.mxu0
    %v265 = vrot.slane %v259, 4
    %v267 = vadd.f32 %v99, %v265
    %v268 = vtanh.pop %v267
    %v269 = vpack.c.bf16 %v268, %v268
    %v271 = vrot.slane %v269, 2
    %v273 = vsel %vm123, %v271, 0
    %275 = vmatprep.subr.bf16.mxu0 0
    %276 = vmatpush1.bf16.msra.mxu0 %v119
    %277 = vmatprep.subr.bf16.mxu0 0
    %278 = vmatpush1.bf16.msra.mxu0 %v120
    %279 = vmatprep.subr.bf16.mxu0 0
    %280 = vmatpush1.bf16.msra.mxu0 0
    %281 = vmatprep.subr.bf16.mxu0 0
    %282 = vmatpush1.bf16.msra.mxu0 0
    %283 = vmatprep.subr.bf16.mxu0 0
    %284 = vmatpush1.bf16.msra.mxu0 0
    %285 = vmatprep.subr.bf16.mxu0 0
    %286 = vmatpush1.bf16.msra.mxu0 0
    %287 = vmatprep.subr.bf16.mxu0 0
    %288 = vmatpush1.bf16.msra.mxu0 0
    %289 = vmatprep.subr.bf16.mxu0 0
    %290 = vmatpush1.bf16.msra.mxu0 0
    %291 = vmatprep.subr.bf16.mxu0 0
    %292 = vmatpush1.bf16.msra.mxu0 0
    %293 = vmatprep.subr.bf16.mxu0 0
    %294 = vmatpush1.bf16.msra.mxu0 0
    %295 = vmatprep.subr.bf16.mxu0 0
    %296 = vmatpush1.bf16.msra.mxu0 0
    %297 = vmatprep.subr.bf16.mxu0 0
    %298 = vmatpush1.bf16.msra.mxu0 0
    %299 = vmatprep.subr.bf16.mxu0 0
    %300 = vmatpush1.bf16.msra.mxu0 0
    %301 = vmatprep.subr.bf16.mxu0 0
    %302 = vmatpush1.bf16.msra.mxu0 0
    %303 = vmatprep.subr.bf16.mxu0 0
    %304 = vmatpush1.bf16.msra.mxu0 0
    %305 = vmatprep.subr.bf16.mxu0 0
    %306 = vmatpush1.bf16.msra.mxu0 0
    %307 = vmatprep.mubr.bf16.mxu0 0
    %308 = vmatmul.mubr.bf16.gmra.mrb[0].mxu0 %v273
    %v309 = vpop.f32.mrb[0].mxu0
    %v310 = vadd.f32 0.0, %v309
    %v311 = vpop.f32.mrb[0].mxu0
    %v312 = vpop.f32.mrb[0].mxu0
    %v313 = vpop.f32.mrb[0].mxu0
    %314 = vdwg.mxu0
    %v316 = vrot.slane %v310, 2
    %v318 = vadd.f32 %v99, %v316
    %v319 = vtanh.pop %v318
    %v320 = vpack.c.bf16 %v319, %v319
    %v322 = vrot.slane %v320, 3
    %v324 = vsel %vm123, %v322, 0
    %326 = vmatprep.subr.bf16.mxu0 0
    %327 = vmatpush1.bf16.msra.mxu0 %v119
    %328 = vmatprep.subr.bf16.mxu0 0
    %329 = vmatpush1.bf16.msra.mxu0 %v120
    %330 = vmatprep.subr.bf16.mxu0 0
    %331 = vmatpush1.bf16.msra.mxu0 0
    %332 = vmatprep.subr.bf16.mxu0 0
    %333 = vmatpush1.bf16.msra.mxu0 0
    %334 = vmatprep.subr.bf16.mxu0 0
    %335 = vmatpush1.bf16.msra.mxu0 0
    %336 = vmatprep.subr.bf16.mxu0 0
    %337 = vmatpush1.bf16.msra.mxu0 0
    %338 = vmatprep.subr.bf16.mxu0 0
    %339 = vmatpush1.bf16.msra.mxu0 0
    %340 = vmatprep.subr.bf16.mxu0 0
    %341 = vmatpush1.bf16.msra.mxu0 0
    %342 = vmatprep.subr.bf16.mxu0 0
    %343 = vmatpush1.bf16.msra.mxu0 0
    %344 = vmatprep.subr.bf16.mxu0 0
    %345 = vmatpush1.bf16.msra.mxu0 0
    %346 = vmatprep.subr.bf16.mxu0 0
    %347 = vmatpush1.bf16.msra.mxu0 0
    %348 = vmatprep.subr.bf16.mxu0 0
    %349 = vmatpush1.bf16.msra.mxu0 0
    %350 = vmatprep.subr.bf16.mxu0 0
    %351 = vmatpush1.bf16.msra.mxu0 0
    %352 = vmatprep.subr.bf16.mxu0 0
    %353 = vmatpush1.bf16.msra.mxu0 0
    %354 = vmatprep.subr.bf16.mxu0 0
    %355 = vmatpush1.bf16.msra.mxu0 0
    %356 = vmatprep.subr.bf16.mxu0 0
    %357 = vmatpush1.bf16.msra.mxu0 0
    %358 = vmatprep.mubr.bf16.mxu0 0
    %359 = vmatmul.mubr.bf16.gmra.mrb[0].mxu0 %v324
    %v360 = vpop.f32.mrb[0].mxu0
    %v361 = vadd.f32 0.0, %v360
    %v362 = vpop.f32.mrb[0].mxu0
    %v363 = vpop.f32.mrb[0].mxu0
    %v364 = vpop.f32.mrb[0].mxu0
    %365 = vdwg.mxu0
    %v366 = vadd.f32 %v102, %v361
    %v367 = vtanh.pop %v366
    %v368 = vpack.c.bf16 %v367, %v367
    %v370 = vsel %vm123, %v368, 0
    %372 = vmatprep.subr.bf16.mxu0 0
    %373 = vmatpush1.bf16.msra.mxu0 %v119
    %374 = vmatprep.subr.bf16.mxu0 0
    %375 = vmatpush1.bf16.msra.mxu0 %v120
    %376 = vmatprep.subr.bf16.mxu0 0
    %377 = vmatpush1.bf16.msra.mxu0 0
    %378 = vmatprep.subr.bf16.mxu0 0
    %379 = vmatpush1.bf16.msra.mxu0 0
    %380 = vmatprep.subr.bf16.mxu0 0
    %381 = vmatpush1.bf16.msra.mxu0 0
    %382 = vmatprep.subr.bf16.mxu0 0
    %383 = vmatpush1.bf16.msra.mxu0 0
    %384 = vmatprep.subr.bf16.mxu0 0
    %385 = vmatpush1.bf16.msra.mxu0 0
    %386 = vmatprep.subr.bf16.mxu0 0
    %387 = vmatpush1.bf16.msra.mxu0 0
    %388 = vmatprep.subr.bf16.mxu0 0
    %389 = vmatpush1.bf16.msra.mxu0 0
    %390 = vmatprep.subr.bf16.mxu0 0
    %391 = vmatpush1.bf16.msra.mxu0 0
    %392 = vmatprep.subr.bf16.mxu0 0
    %393 = vmatpush1.bf16.msra.mxu0 0
    %394 = vmatprep.subr.bf16.mxu0 0
    %395 = vmatpush1.bf16.msra.mxu0 0
    %396 = vmatprep.subr.bf16.mxu0 0
    %397 = vmatpush1.bf16.msra.mxu0 0
    %398 = vmatprep.subr.bf16.mxu0 0
    %399 = vmatpush1.bf16.msra.mxu0 0
    %400 = vmatprep.subr.bf16.mxu0 0
    %401 = vmatpush1.bf16.msra.mxu0 0
    %402 = vmatprep.subr.bf16.mxu0 0
    %403 = vmatpush1.bf16.msra.mxu0 0
    %404 = vmatprep.mubr.bf16.mxu0 0
    %405 = vmatmul.mubr.bf16.gmra.mrb[0].mxu0 %v370
    %v406 = vpop.f32.mrb[0].mxu0
    %v407 = vadd.f32 0.0, %v406
    %v408 = vpop.f32.mrb[0].mxu0
    %v409 = vpop.f32.mrb[0].mxu0
    %v410 = vpop.f32.mrb[0].mxu0
    %411 = vdwg.mxu0
    %v413 = vrot.slane %v407, 6
    %v415 = vadd.f32 %v102, %v413
    %v416 = vtanh.pop %v415
    %v417 = vpack.c.bf16 %v416, %v416
    %v419 = vrot.slane %v417, 1
    %v421 = vsel %vm123, %v419, 0
    %423 = vmatprep.subr.bf16.mxu0 0
    %424 = vmatpush1.bf16.msra.mxu0 %v119
    %425 = vmatprep.subr.bf16.mxu0 0
    %426 = vmatpush1.bf16.msra.mxu0 %v120
    %427 = vmatprep.subr.bf16.mxu0 0
    %428 = vmatpush1.bf16.msra.mxu0 0
    %429 = vmatprep.subr.bf16.mxu0 0
    %430 = vmatpush1.bf16.msra.mxu0 0
    %431 = vmatprep.subr.bf16.mxu0 0
    %432 = vmatpush1.bf16.msra.mxu0 0
    %433 = vmatprep.subr.bf16.mxu0 0
    %434 = vmatpush1.bf16.msra.mxu0 0
    %435 = vmatprep.subr.bf16.mxu0 0
    %436 = vmatpush1.bf16.msra.mxu0 0
    %437 = vmatprep.subr.bf16.mxu0 0
    %438 = vmatpush1.bf16.msra.mxu0 0
    %439 = vmatprep.subr.bf16.mxu0 0
    %440 = vmatpush1.bf16.msra.mxu0 0
    %441 = vmatprep.subr.bf16.mxu0 0
    %442 = vmatpush1.bf16.msra.mxu0 0
    %443 = vmatprep.subr.bf16.mxu0 0
    %444 = vmatpush1.bf16.msra.mxu0 0
    %445 = vmatprep.subr.bf16.mxu0 0
    %446 = vmatpush1.bf16.msra.mxu0 0
    %447 = vmatprep.subr.bf16.mxu0 0
    %448 = vmatpush1.bf16.msra.mxu0 0
    %449 = vmatprep.subr.bf16.mxu0 0
    %450 = vmatpush1.bf16.msra.mxu0 0
    %451 = vmatprep.subr.bf16.mxu0 0
    %452 = vmatpush1.bf16.msra.mxu0 0
    %453 = vmatprep.subr.bf16.mxu0 0
    %454 = vmatpush1.bf16.msra.mxu0 0
    %455 = vmatprep.mubr.bf16.mxu0 0
    %456 = vmatmul.mubr.bf16.gmra.mrb[0].mxu0 %v421
    %v457 = vpop.f32.mrb[0].mxu0
    %v458 = vadd.f32 0.0, %v457
    %v459 = vpop.f32.mrb[0].mxu0
    %v460 = vpop.f32.mrb[0].mxu0
    %v461 = vpop.f32.mrb[0].mxu0
    %462 = vdwg.mxu0
    %v464 = vrot.slane %v458, 4
    %v466 = vadd.f32 %v102, %v464
    %v467 = vtanh.pop %v466
    %v468 = vpack.c.bf16 %v467, %v467
    %v470 = vrot.slane %v468, 2
    %v472 = vsel %vm123, %v470, 0
    %474 = vmatprep.subr.bf16.mxu0 0
    %475 = vmatpush1.bf16.msra.mxu0 %v119
    %476 = vmatprep.subr.bf16.mxu0 0
    %477 = vmatpush1.bf16.msra.mxu0 %v120
    %478 = vmatprep.subr.bf16.mxu0 0
    %479 = vmatpush1.bf16.msra.mxu0 0
    %480 = vmatprep.subr.bf16.mxu0 0
    %481 = vmatpush1.bf16.msra.mxu0 0
    %482 = vmatprep.subr.bf16.mxu0 0
    %483 = vmatpush1.bf16.msra.mxu0 0
    %484 = vmatprep.subr.bf16.mxu0 0
    %485 = vmatpush1.bf16.msra.mxu0 0
    %486 = vmatprep.subr.bf16.mxu0 0
    %487 = vmatpush1.bf16.msra.mxu0 0
    %488 = vmatprep.subr.bf16.mxu0 0
    %489 = vmatpush1.bf16.msra.mxu0 0
    %490 = vmatprep.subr.bf16.mxu0 0
    %491 = vmatpush1.bf16.msra.mxu0 0
    %492 = vmatprep.subr.bf16.mxu0 0
    %493 = vmatpush1.bf16.msra.mxu0 0
    %494 = vmatprep.subr.bf16.mxu0 0
    %495 = vmatpush1.bf16.msra.mxu0 0
    %496 = vmatprep.subr.bf16.mxu0 0
    %497 = vmatpush1.bf16.msra.mxu0 0
    %498 = vmatprep.subr.bf16.mxu0 0
    %499 = vmatpush1.bf16.msra.mxu0 0
    %500 = vmatprep.subr.bf16.mxu0 0
    %501 = vmatpush1.bf16.msra.mxu0 0
    %502 = vmatprep.subr.bf16.mxu0 0
    %503 = vmatpush1.bf16.msra.mxu0 0
    %504 = vmatprep.subr.bf16.mxu0 0
    %505 = vmatpush1.bf16.msra.mxu0 0
    %506 = vmatprep.mubr.bf16.mxu0 0
    %507 = vmatmul.mubr.bf16.gmra.mrb[0].mxu0 %v472
    %v508 = vpop.f32.mrb[0].mxu0
    %v509 = vadd.f32 0.0, %v508
    %v510 = vpop.f32.mrb[0].mxu0
    %v511 = vpop.f32.mrb[0].mxu0
    %v512 = vpop.f32.mrb[0].mxu0
    %513 = vdwg.mxu0
    %v515 = vrot.slane %v509, 2
    %v517 = vadd.f32 %v102, %v515
    %v518 = vtanh.pop %v517
    %vm519 = vcmask 261126
    %520 = vst.msk [vmem:[#allocation6 - $0x6] sm:$0xc0] %vm519, %v518
    %v521 = vsel %vm60, %v168, %v217
    %vm522 = vcmask 1043456
    %v523 = vsel %vm522, %v521, %v268
    %vm524 = vcmask 1045504
    %v525 = vsel %vm524, %v523, %v319
    %v526 = vsel %vm60, %v367, %v416
    %v527 = vsel %vm522, %v526, %v467
    %v528 = vsel %vm524, %v527, %v518
    %v529 = vld [vmem:[%s5] sm:$0xff]
    %v530 = vld [vmem:[%s5 + $0x8] sm:$0xff]
    %v531 = vld [vmem:[%s5 + $0x10] sm:$0xff]
    %v532 = vld [vmem:[%s5 + $0x18] sm:$0xff]
    %v533 = vld [vmem:[%s6] sm:$0x1]
    %v535 = vlaneseq
    %v536 = vshrl.u32 %v535, 7
    %v537 = vsub.s32 0, %v536
    %v538 = vrot.slane %v533, %v537
    %v541 = vsel %vm123, %v525, 0
    %v544 = vsel %vm123, %v528, 0
    %546 = vmatprep.subr.mxu0 0.0
    %547 = vmatpush1.msra.mxu0 %v529
    %548 = vmatprep.subr.mxu0 0.0
    %549 = vmatpush1.msra.mxu0 %v530
    %550 = vmatprep.subr.mxu0 0.0
    %551 = vmatpush1.msra.mxu0 %v531
    %552 = vmatprep.subr.mxu0 0.0
    %553 = vmatpush1.msra.mxu0 %v532
    %554 = vmatprep.subr.mxu0 0.0
    %555 = vmatpush1.msra.mxu0 0.0
    %556 = vmatprep.subr.mxu0 0.0
    %557 = vmatpush1.msra.mxu0 0.0
    %558 = vmatprep.subr.mxu0 0.0
    %559 = vmatpush1.msra.mxu0 0.0
    %560 = vmatprep.subr.mxu0 0.0
    %561 = vmatpush1.msra.mxu0 0.0
    %562 = vmatprep.subr.mxu0 0.0
    %563 = vmatpush1.msra.mxu0 0.0
    %564 = vmatprep.subr.mxu0 0.0
    %565 = vmatpush1.msra.mxu0 0.0
    %566 = vmatprep.subr.mxu0 0.0
    %567 = vmatpush1.msra.mxu0 0.0
    %568 = vmatprep.subr.mxu0 0.0
    %569 = vmatpush1.msra.mxu0 0.0
    %570 = vmatprep.subr.mxu0 0.0
    %571 = vmatpush1.msra.mxu0 0.0
    %572 = vmatprep.subr.mxu0 0.0
    %573 = vmatpush1.msra.mxu0 0.0
    %574 = vmatprep.subr.mxu0 0.0
    %575 = vmatpush1.msra.mxu0 0.0
    %576 = vmatprep.subr.mxu0 0.0
    %577 = vmatpush1.msra.mxu0 0.0
    %578 = vmatprep.subr.mxu0 0.0
    %579 = vmatpush1.msra.mxu0 0.0
    %580 = vmatprep.subr.mxu0 0.0
    %581 = vmatpush1.msra.mxu0 0.0
    %582 = vmatprep.subr.mxu0 0.0
    %583 = vmatpush1.msra.mxu0 0.0
    %584 = vmatprep.subr.mxu0 0.0
    %585 = vmatpush1.msra.mxu0 0.0
    %586 = vmatprep.subr.mxu0 0.0
    %587 = vmatpush1.msra.mxu0 0.0
    %588 = vmatprep.subr.mxu0 0.0
    %589 = vmatpush1.msra.mxu0 0.0
    %590 = vmatprep.subr.mxu0 0.0
    %591 = vmatpush1.msra.mxu0 0.0
    %592 = vmatprep.subr.mxu0 0.0
    %593 = vmatpush1.msra.mxu0 0.0
    %594 = vmatprep.subr.mxu0 0.0
    %595 = vmatpush1.msra.mxu0 0.0
    %596 = vmatprep.subr.mxu0 0.0
    %597 = vmatpush1.msra.mxu0 0.0
    %598 = vmatprep.subr.mxu0 0.0
    %599 = vmatpush1.msra.mxu0 0.0
    %600 = vmatprep.subr.mxu0 0.0
    %601 = vmatpush1.msra.mxu0 0.0
    %602 = vmatprep.subr.mxu0 0.0
    %603 = vmatpush1.msra.mxu0 0.0
    %604 = vmatprep.subr.mxu0 0.0
    %605 = vmatpush1.msra.mxu0 0.0
    %606 = vmatprep.subr.mxu0 0.0
    %607 = vmatpush1.msra.mxu0 0.0
    %608 = vmatprep.subr.mxu0 0.0
    %609 = vmatpush1.msra.mxu0 0.0
    %610 = vmatprep.mubr.f32.mxu0 0.0
    %611 = vmatmul.mubr.f32.gmra.mrb[0].mxu0 %v541
    %v612 = vpop.f32.mrb[0].mxu0
    %v613 = vadd.f32 %v538, %v612
    %v614 = vpop.f32.mrb[0].mxu0
    %615 = vmatprep.mubr.f32.mxu0 0.0
    %616 = vmatmul.mubr.f32.gmra.mrb[0].mxu0 %v544
    %v617 = vpop.f32.mrb[0].mxu0
    %v618 = vadd.f32 %v538, %v617
    %v619 = vpop.f32.mrb[0].mxu0
    %620 = vdwg.mxu0
    %621 = vst [vmem:[#allocation5] sm:$0xff] %v613
    %622 = vst [vmem:[#allocation5 + $0x8] sm:$0xff] %v618
    // Predicated region
    $region34: #{rnn_forward.1} parent=1 // pred_check
      _
    $region35: #{rnn_forward.1} parent=1 // pred_check_branch
      %624 = sbr.rel (0) target = $region37
    $region36: #{rnn_forward.1} parent=1 // pred_region
      %s626 = ssub.s32 256, 256
      %627 = vsyncadd [#allocation4], %s626
      %s628 = sshll.u32 [#allocation5], 4
      %s629 = int_to_ptr.vmem [resolvable:$true] %s628
      %634 = dma.vmem_to_hbm [thread:$0]  %s629, 256, %s7, [#allocation4], 128, 128, 8
    $region37: #{rnn_forward.1} parent=1 // pred_fallthru
      _
    // Predicated region
    $region38: #{rnn_forward.1} parent=1 // pred_check
      _
    $region39: #{rnn_forward.1} parent=1 // pred_check_branch
      %636 = sbr.rel (0) target = $region41
    $region40: #{rnn_forward.1} parent=1 // pred_region
      %s638 = ssub.s32 32, 32
      %639 = vsyncadd [#allocation7], %s638
      %s641 = sshll.u32 [#allocation6], 4
      %s642 = int_to_ptr.vmem [resolvable:$true] %s641
      %644 = dma.vmem_to_hbm [thread:$0]  %s642, 32, %s8, [#allocation7]
    $region41: #{rnn_forward.1} parent=1 // pred_fallthru
      _
    // Predicated region
    $region42: #{rnn_forward.1} parent=1 // pred_check
      _
    $region43: #{rnn_forward.1} parent=1 // pred_check_branch
      %646 = sbr.rel (0) target = $region45
    $region44: #{rnn_forward.1} parent=1 // pred_region
      %647 = dma.done [#allocation4], 256
    $region45: #{rnn_forward.1} parent=1 // pred_fallthru
      _
    // Predicated region
    $region46: #{rnn_forward.1} parent=1 // pred_check
      _
    $region47: #{rnn_forward.1} parent=1 // pred_check_branch
      %649 = sbr.rel (0) target = $region49
    $region48: #{rnn_forward.1} parent=1 // pred_region
      %650 = dma.done [#allocation7], 32
    $region49: #{rnn_forward.1} parent=1 // pred_fallthru
      _
    %651 = vsyncpa [#allocation3], 1
    %652 = vsyncpa [#allocation4], 1
    %653 = vsyncpa [#allocation7], 1

</llo_original>
